<compile_context>
chip_gen: v7x
topology: tpu7x:2x2x1
jax: 0.10.0
libtpu: 0.0.40
codegen_flags: <defaults>
</compile_context>

<pallas_src>
import functools

import jax
import jax.numpy as jnp
from jax.experimental import pallas as pl
from jax.experimental.pallas import tpu as pltpu


def _make_rmsnorm_lmhead_kernel(eps: float):
    """Kernel closure with rms_norm_eps baked in as a static constant."""

    def kernel(x_ref, gamma_ref, w_ref, out_ref, xn_ref):
        # x_ref:     (TM, H)   hidden-state row block (resident across the V axis)
        # gamma_ref: (1, H)    RMSNorm scale
        # w_ref:     (H, TV)   lm_head weight tile, already (H, V)-oriented
        # out_ref:   (TM, TV)  logits tile
        # xn_ref:    (TM, H)   VMEM scratch: normalized rows in matmul dtype

        # Hoist RMSNorm: compute once per M-tile, reuse across all V-tiles.
        @pl.when(pl.program_id(1) == 0)
        def _():
            x = x_ref[...].astype(jnp.float32)
            var = jnp.mean(x * x, axis=-1, keepdims=True)
            inv = jax.lax.rsqrt(var + eps)
            xn = (x * inv) * gamma_ref[...].astype(jnp.float32)
            xn_ref[...] = xn.astype(xn_ref.dtype)

        # lm_head: logits_tile = xn @ W_tile  (bf16 x bf16 -> f32 accumulate).
        out_ref[...] = jnp.dot(
            xn_ref[...], w_ref[...], preferred_element_type=jnp.float32
        ).astype(out_ref.dtype)

    return kernel


def llama_causal_lm_pipe_forward(
    hidden_states,
    attention_mask,
    position_ids,
    norm_weight,
    lm_head_weight,
    rms_norm_eps,
    *,
    tm: int = 256,
    tv: int = 512,
    matmul_dtype=jnp.bfloat16,
):
    """Mirrors LlamaCausalLMwithPipe.forward((hidden_states, attention_mask, position_ids)).

    attention_mask / position_ids are accepted but unused (as in the PyTorch module).
    Returns logits of shape (batch, seq, vocab).
    """
    del attention_mask, position_ids  # unused by the reference forward
    B, S, H = hidden_states.shape
    V = lm_head_weight.shape[0]
    M = B * S

    # Pre-transpose to (H, V) and cast to the MXU-native matmul dtype once,
    # outside the kernel (recurring in-kernel transpose avoided).
    w_hv = jnp.asarray(lm_head_weight, dtype=matmul_dtype).T  # (H, V)

    x2d = hidden_states.reshape(M, H)
    gamma = norm_weight.reshape(1, H)

    tm = min(tm, M)
    tv = min(tv, V)

    # Pad ragged edges so the (M, V) grid divides evenly; sliced off at the end.
    Mp = pl.cdiv(M, tm) * tm
    Vp = pl.cdiv(V, tv) * tv
    if Mp != M:
        x2d = jnp.pad(x2d, ((0, Mp - M), (0, 0)))
    if Vp != V:
        w_hv = jnp.pad(w_hv, ((0, 0), (0, Vp - V)))

    grid = (Mp // tm, Vp // tv)

    out = pl.pallas_call(
        _make_rmsnorm_lmhead_kernel(float(rms_norm_eps)),
        out_shape=jax.ShapeDtypeStruct((Mp, Vp), hidden_states.dtype),
        grid_spec=pltpu.PrefetchScalarGridSpec(
            num_scalar_prefetch=0,
            grid=grid,
            in_specs=[
                # x row block: same block for every j -> resident across the V axis.
                pl.BlockSpec((tm, H), lambda i, j: (i, 0)),
                pl.BlockSpec((1, H), lambda i, j: (0, 0)),
                # Weight streamed tile-by-tile along V (double-buffered by Pallas).
                pl.BlockSpec((H, tv), lambda i, j: (0, j)),
            ],
            out_specs=pl.BlockSpec((tm, tv), lambda i, j: (i, j)),
            scratch_shapes=[pltpu.VMEM((tm, H), matmul_dtype)],
        ),
        compiler_params=pltpu.CompilerParams(
            # M axis is independent -> parallel (megacore on v7x);
            # V axis reuses the per-M-tile xn scratch -> arbitrary (sequential).
            dimension_semantics=("parallel", "arbitrary"),
            # Tiles sized well under v7x's 64 MiB VMEM; raise scoped limit to
            # keep double-buffering alive at real model sizes.
            vmem_limit_bytes=48 * 1024 * 1024,
        ),
    )(x2d, gamma, w_hv)

    if Mp != M or Vp != V:
        out = out[:M, :V]
    return out.reshape(B, S, V)


if __name__ == "__main__":
    # Small LlamaConfig-like settings (pretraining_tp = 1 branch).
    batch, seq, hidden, vocab = 2, 64, 128, 1024
    rms_norm_eps = 1e-6

    key = jax.random.PRNGKey(0)
    k_x, k_w = jax.random.split(key)

    hidden_states = jax.random.normal(k_x, (batch, seq, hidden), dtype=jnp.float32)
    attention_mask = jnp.ones((batch, seq), dtype=jnp.float32)       # unused by forward
    position_ids = jnp.arange(seq, dtype=jnp.int32)[None, :].repeat(batch, 0)  # unused

    # Deterministic parameter init (synthetic, not a checkpoint load).
    norm_weight = jnp.ones((hidden,), dtype=jnp.float32)             # LlamaRMSNorm init
    lm_head_weight = (
        jax.random.normal(k_w, (vocab, hidden), dtype=jnp.float32)
        * (1.0 / jnp.sqrt(hidden))
    )                                                                # nn.Linear-style scale

    fwd = jax.jit(
        functools.partial(llama_causal_lm_pipe_forward, rms_norm_eps=rms_norm_eps)
    )
    logits = fwd(hidden_states, attention_mask, position_ids, norm_weight, lm_head_weight)
    jax.block_until_ready(logits)

    # Reference in plain JAX, matching the kernel's numerics:
    # RMSNorm in f32, bf16 matmul inputs, f32 accumulation.
    x = hidden_states.astype(jnp.float32)
    var = jnp.mean(x * x, axis=-1, keepdims=True)
    xn = x * jax.lax.rsqrt(var + rms_norm_eps) * norm_weight.astype(jnp.float32)
    ref = jax.lax.dot_general(
        xn.reshape(batch * seq, hidden).astype(jnp.bfloat16),
        lm_head_weight.astype(jnp.bfloat16).T,
        dimension_numbers=(((1,), (0,)), ((), ())),
        preferred_element_type=jnp.float32,
    ).reshape(batch, seq, vocab).astype(logits.dtype)

    assert logits.shape == (batch, seq, vocab)
    assert jnp.allclose(logits, ref, atol=2e-2, rtol=2e-2), float(
        jnp.max(jnp.abs(logits - ref))
    )

    print("KERNEL_OK")
</pallas_src>

<mosaic_0001>
module attributes {stable_mosaic.version = 11 : i64} {
  func.func @kernel(%arg0: i32, %arg1: i32, %arg2: memref<128x128xf32, #tpu.memory_space<vmem>>, %arg3: memref<1x128xf32, #tpu.memory_space<vmem>>, %arg4: memref<128x512xbf16, #tpu.memory_space<vmem>>, %arg5: memref<128x512xf32, #tpu.memory_space<vmem>>, %arg6: memref<128x128xbf16, #tpu.memory_space<vmem>>) attributes {dimension_semantics = [#tpu.dimension_semantics<parallel>, #tpu.dimension_semantics<arbitrary>], iteration_bounds = array<i64: 1, 2>, scalar_prefetch = 0 : i64, scratch_operands = 1 : i64, tpu.core_type = #tpu.core_type<tc>, window_params = [{transform_indices = @transform_0, window_bounds = array<i64: 128, 128>}, {pipeline_mode = #tpu.pipeline_mode<synchronous>, transform_indices = @transform_1, window_bounds = array<i64: 1, 128>}, {transform_indices = @transform_2, window_bounds = array<i64: 128, 512>}, {transform_indices = @transform_3, window_bounds = array<i64: 128, 512>}]} {
    %c0_i32 = arith.constant 0 : i32
    %0 = arith.cmpi eq, %arg1, %c0_i32 : i32
    %1 = arith.extui %0 : i1 to i32
    %c0_i32_0 = arith.constant 0 : i32
    %2 = arith.cmpi ne, %1, %c0_i32_0 : i32
    scf.if %2 {
      %c0_6 = arith.constant 0 : index
      %c0_7 = arith.constant 0 : index
      %7 = vector.load %arg2[%c0_6, %c0_7] : memref<128x128xf32, #tpu.memory_space<vmem>>, vector<128x128xf32>
      %8 = arith.mulf %7, %7 : vector<128x128xf32>
      %cst_8 = arith.constant dense<0.000000e+00> : vector<128xf32>
      %9 = vector.multi_reduction <add>, %8, %cst_8 [1] : vector<128x128xf32> to vector<128xf32>
      %10 = vector.shape_cast %9 : vector<128xf32> to vector<128x1xf32>
      %cst_9 = arith.constant 1.280000e+02 : f32
      %11 = vector.broadcast %cst_9 : f32 to vector<128x1xf32>
      %12 = arith.divf %10, %11 : vector<128x1xf32>
      %cst_10 = arith.constant 9.99999997E-7 : f32
      %13 = vector.broadcast %cst_10 : f32 to vector<128x1xf32>
      %14 = arith.addf %12, %13 : vector<128x1xf32>
      %15 = math.rsqrt %14 : vector<128x1xf32>
      %16 = vector.broadcast %15 : vector<128x1xf32> to vector<128x128xf32>
      %17 = arith.mulf %7, %16 : vector<128x128xf32>
      %c0_11 = arith.constant 0 : index
      %c0_12 = arith.constant 0 : index
      %18 = vector.load %arg3[%c0_11, %c0_12] : memref<1x128xf32, #tpu.memory_space<vmem>>, vector<1x128xf32>
      %19 = vector.broadcast %18 : vector<1x128xf32> to vector<128x128xf32>
      %20 = arith.mulf %17, %19 : vector<128x128xf32>
      %21 = arith.truncf %20 : vector<128x128xf32> to vector<128x128xbf16>
      %c0_13 = arith.constant 0 : index
      %c0_14 = arith.constant 0 : index
      %22 = vector.load %arg6[%c0_13, %c0_14] : memref<128x128xbf16, #tpu.memory_space<vmem>>, vector<128x128xbf16>
      tpu.vector_store %arg6[%c0_13, %c0_14], %21 {strides = array<i32>} : memref<128x128xbf16, #tpu.memory_space<vmem>>, vector<128x128xbf16>,
    } else {
    }
    %c0 = arith.constant 0 : index
    %c0_1 = arith.constant 0 : index
    %3 = vector.load %arg6[%c0, %c0_1] : memref<128x128xbf16, #tpu.memory_space<vmem>>, vector<128x128xbf16>
    %c0_2 = arith.constant 0 : index
    %c0_3 = arith.constant 0 : index
    %4 = vector.load %arg4[%c0_2, %c0_3] : memref<128x512xbf16, #tpu.memory_space<vmem>>, vector<128x512xbf16>
    %cst = arith.constant dense<0.000000e+00> : vector<128x512xf32>
    %5 = tpu.matmul %3, %4, %cst {dimension_numbers = #tpu.dot_dimension_numbers<[1], [0], [0], [1], [0, 0, 1, 1], [], []>} : vector<128x128xbf16>, vector<128x512xbf16>, vector<128x512xf32> -> vector<128x512xf32>
    %c0_4 = arith.constant 0 : index
    %c0_5 = arith.constant 0 : index
    %6 = vector.load %arg5[%c0_4, %c0_5] : memref<128x512xf32, #tpu.memory_space<vmem>>, vector<128x512xf32>
    tpu.vector_store %arg5[%c0_4, %c0_5], %5 {strides = array<i32>} : memref<128x512xf32, #tpu.memory_space<vmem>>, vector<128x512xf32>,
    return
  }
  func.func @transform_0(%arg0: i32, %arg1: i32) -> (i32, i32) {
    %c0_i32 = arith.constant 0 : i32
    %c0_i32_0 = arith.constant 0 : i32
    return %arg0, %c0_i32 : i32, i32
  }
  func.func @transform_1(%arg0: i32, %arg1: i32) -> (i32, i32) {
    %c0_i32 = arith.constant 0 : i32
    %c0_i32_0 = arith.constant 0 : i32
    %c0_i32_1 = arith.constant 0 : i32
    return %c0_i32, %c0_i32_0 : i32, i32
  }
  func.func @transform_2(%arg0: i32, %arg1: i32) -> (i32, i32) {
    %c0_i32 = arith.constant 0 : i32
    %c0_i32_0 = arith.constant 0 : i32
    return %c0_i32, %arg1 : i32, i32
  }
  func.func @transform_3(%arg0: i32, %arg1: i32) -> (i32, i32) {
    %c0_i32 = arith.constant 0 : i32
    return %arg0, %arg1 : i32, i32
  }
}

</mosaic_0001>

<llo_original>
// kernel: llama_causal_lm_pipe_forward.1
$region0: #{llama_causal_lm_pipe_forward.1}
  #allocation0 [shape = 'u32[]', space=smem, size = 0x4, offset = 0x4, fixed_abs, tag = 'smem constant byte address 0x4 - core index']
  #allocation1 [shape = 'u32[144,128]{1,0:T(1,128)}', space=vmem, size = 0x12000, scoped, tag = 'internal scratch']
  #allocation2 [shape = 'bf16[128,128]{1,0:T(16,128)(2,1)}', space=vmem, size = 0x8000, scoped, tag = 'scratch operand']
  %s0 = inlined_call_operand.vmem [shape: f32[128,128], index: 0, kind: input, shape index: {}]
  %s1 = inlined_call_operand.vmem [shape: f32[1,128], index: 1, kind: input, shape index: {}]
  %s2 = inlined_call_operand.vmem [shape: bf16[128,1024], index: 2, kind: input, shape index: {}]
  %s3 = inlined_call_operand.hbm [shape: f32[128,1024], index: 3, kind: output, shape index: {}]
  %s4 = sld [smem:[#allocation0]]
  $region72: #{llama_causal_lm_pipe_forward.1} parent=0
    _
  %s6 = ssub.s32 1, %s4
  %s7 = scalar_select 0, %s6, %s4
  $region1: #{llama_causal_lm_pipe_forward.1} parent=0
    #allocation3 [shape = 'u8[262144]{0}', space=vmem, size = 0x40000, scoped, tag = 'input window, operand 2']
    #allocation4 [shape = 'u8[524288]{0}', space=vmem, size = 0x80000, scoped, tag = 'output window, operand 0']
    #allocation5 [shape = 's32[2]{0}', space=sflag, size = 0x8, scoped, tag = 'scoped memory for llama_causal_lm_pipe_forward.1']
    %8 = vsyncpa [#allocation5], 0
    %s9 = scalar_lea.sflag [#allocation5], 1
    %10 = vsyncpa %s9, 0
    loop: start=0, step=1, limit=4
    $region2: #{llama_causal_lm_pipe_forward.1} parent=1 // loop_pre_header
      _
    $region3: #{llama_causal_lm_pipe_forward.1} parent=1 // loop_header
      %s12 = sphi 0, %s16
      %p13 = scmp.ge.s32.totalorder %s12, 4
      %s19 = sphi 0, %s31
      %s20 = sphi 0, %s27
      %s21 = sphi 0, %s19
      %s22 = sphi 0, %s20
      %s23 = sphi 0, %s21
      %s24 = sphi 0, %s22
      %s34 = sphi 0, %s36
      %s37 = sphi 0, %s34
      %s38 = sphi 0, %s37
      %s54 = sphi 0, %s38
      %s58 = sphi 0, %s58
      %s60 = sphi 0, %s58
      %s61 = sphi 0, %s60
      %s75 = sphi 0, %s61
      %s81 = sphi 0, %s83
      %s84 = sphi 0, %s81
      %s85 = sphi 0, %s84
      %s101 = sphi 0, %s85
      %s109 = sphi 0, %s111
      %s112 = sphi 0, %s109
      %s113 = sphi 0, %s112
      %s129 = sphi 0, %s113
    $region4: #{llama_causal_lm_pipe_forward.1} parent=1 // loop_header_branch
      %15 = sbr.rel (%p13) target = $region8
    $region5: #{llama_causal_lm_pipe_forward.1} parent=1 // loop_body
      %s17 = ssub.s32 %s12, 1
      %s18 = ssub.s32 %s12, 2
      %s25 = sadd.s32 1, %s20
      %p26 = scmp.ge.s32.totalorder %s25, 2
      %s27 = scalar_select %p26, 0, %s25
      %s28 = sadd.s32 1, %s19
      %s29 = scalar_select %p26, %s28, %s19
      %p30 = scmp.ge.s32.totalorder %s29, 1
      %s31 = scalar_select %p30, 0, %s29
      %s32 = ssub.s32 %s19, %s31
      %p33 = scmp.eq.s32.totalorder %s32, 0
      %s35 = sadd.s32 %s34, 1
      %s36 = scalar_select %p33, %s34, %s35
      %p39 = pneg %p33
      %p40 = scmp.eq.s32.totalorder %s12, 1
      %p41 = por %p39, %p40
      %p42 = scmp.ne.s32.totalorder %s34, %s37
      %p43 = scmp.eq.s32.totalorder %s12, 0
      %p44 = por %p42, %p43
      %p45 = scmp.ne.s32.totalorder %s34, %s37
      %p46 = scmp.eq.s32.totalorder %s17, 1
      %p47 = por %p45, %p46
      %p48 = scmp.ne.s32.totalorder %s37, %s38
      %p49 = scmp.eq.s32.totalorder %s17, 0
      %p50 = por %p48, %p49
      %p51 = scmp.ne.s32.totalorder %s37, %s38
      %p52 = scmp.eq.s32.totalorder %s18, 1
      %p53 = por %p51, %p52
      %p55 = scmp.ne.s32.totalorder %s38, %s54
      %p56 = scmp.eq.s32.totalorder %s18, 0
      %p57 = por %p55, %p56
      %s59 = sadd.s32 %s58, 1
      %p62 = scmp.eq.s32.totalorder %s12, 1
      %p63 = scmp.ne.s32.totalorder %s58, %s60
      %p64 = scmp.eq.s32.totalorder %s12, 0
      %p65 = por %p63, %p64
      %p66 = scmp.ne.s32.totalorder %s58, %s60
      %p67 = scmp.eq.s32.totalorder %s17, 1
      %p68 = por %p66, %p67
      %p69 = scmp.ne.s32.totalorder %s60, %s61
      %p70 = scmp.eq.s32.totalorder %s17, 0
      %p71 = por %p69, %p70
      %p72 = scmp.ne.s32.totalorder %s60, %s61
      %p73 = scmp.eq.s32.totalorder %s18, 1
      %p74 = por %p72, %p73
      %p76 = scmp.ne.s32.totalorder %s61, %s75
      %p77 = scmp.eq.s32.totalorder %s18, 0
      %p78 = por %p76, %p77
      %s79 = ssub.s32 %s20, %s27
      %p80 = scmp.eq.s32.totalorder %s79, 0
      %s82 = sadd.s32 %s81, 1
      %s83 = scalar_select %p80, %s81, %s82
      %p86 = pneg %p80
      %p87 = scmp.eq.s32.totalorder %s12, 1
      %p88 = por %p86, %p87
      %p89 = scmp.ne.s32.totalorder %s81, %s84
      %p90 = scmp.eq.s32.totalorder %s12, 0
      %p91 = por %p89, %p90
      %p92 = scmp.ne.s32.totalorder %s81, %s84
      %p93 = scmp.eq.s32.totalorder %s17, 1
      %p94 = por %p92, %p93
      %p95 = scmp.ne.s32.totalorder %s84, %s85
      %p96 = scmp.eq.s32.totalorder %s17, 0
      %p97 = por %p95, %p96
      %p98 = scmp.ne.s32.totalorder %s84, %s85
      %p99 = scmp.eq.s32.totalorder %s18, 1
      %p100 = por %p98, %p99
      %p102 = scmp.ne.s32.totalorder %s85, %s101
      %p103 = scmp.eq.s32.totalorder %s18, 0
      %p104 = por %p102, %p103
      %s105 = ssub.s32 %s19, %s31
      %s106 = ssub.s32 %s20, %s27
      %s107 = sor.u32 %s105, %s106
      %p108 = scmp.eq.s32.totalorder %s107, 0
      %s110 = sadd.s32 %s109, 1
      %s111 = scalar_select %p108, %s109, %s110
      %p114 = pneg %p108
      %p115 = scmp.eq.s32.totalorder %s12, 1
      %p116 = por %p114, %p115
      %p117 = scmp.ne.s32.totalorder %s109, %s112
      %p118 = scmp.eq.s32.totalorder %s12, 0
      %p119 = por %p117, %p118
      %p120 = scmp.ne.s32.totalorder %s109, %s112
      %p121 = scmp.eq.s32.totalorder %s17, 1
      %p122 = por %p120, %p121
      %p123 = scmp.ne.s32.totalorder %s112, %s113
      %p124 = scmp.eq.s32.totalorder %s17, 0
      %p125 = por %p123, %p124
      %p126 = scmp.ne.s32.totalorder %s112, %s113
      %p127 = scmp.eq.s32.totalorder %s18, 1
      %p128 = por %p126, %p127
      %p130 = scmp.ne.s32.totalorder %s113, %s129
      %p131 = scmp.eq.s32.totalorder %s18, 0
      %p132 = por %p130, %p131
      %p133 = scmp.le.s32.totalorder 1, %s12
      %p134 = scmp.lt.s32.totalorder %s12, 3
      %p135 = pnand %p133, %p134
      %p136 = pneg %p135
      // Predicated region
      $region9: #{llama_causal_lm_pipe_forward.1} parent=5 // pred_check
        _
      $region10: #{llama_causal_lm_pipe_forward.1} parent=5 // pred_check_branch
        %138 = sbr.rel (%p135) target = $region12
      $region11: #{llama_causal_lm_pipe_forward.1} parent=5 // pred_region
        %s139 = ssub.s32 %s12, 1
        // Predicated region
        $region13: #{llama_causal_lm_pipe_forward.1} parent=11 // pred_check
          %p140 = pneg %p50
        $region14: #{llama_causal_lm_pipe_forward.1} parent=11 // pred_check_branch
          %142 = sbr.rel (%p140) target = $region16
        $region15: #{llama_causal_lm_pipe_forward.1} parent=11 // pred_region
          %s143 = smul.u32 16, %s21
          %p144 = scmp.lt.s32.totalorder %s143, 15
          %s145 = scalar_select %p144, %s143, 15
          %s146 = smul.addr %s145, 8
          %s147 = scalar_lea.vmem %s0, %s146
          %s148 = smul.u32 16, %s21
        $region16: #{llama_causal_lm_pipe_forward.1} parent=11 // pred_fallthru
          _
        // Predicated region
        $region17: #{llama_causal_lm_pipe_forward.1} parent=11 // pred_check
          %p149 = pneg %p71
        $region18: #{llama_causal_lm_pipe_forward.1} parent=11 // pred_check_branch
          %151 = sbr.rel (%p149) target = $region20
        $region19: #{llama_causal_lm_pipe_forward.1} parent=11 // pred_region
          _
        $region20: #{llama_causal_lm_pipe_forward.1} parent=11 // pred_fallthru
          _
      $region12: #{llama_causal_lm_pipe_forward.1} parent=5 // pred_fallthru
        _
      %p152 = scmp.lt.s32.totalorder %s12, 2
      // Predicated region
      $region21: #{llama_causal_lm_pipe_forward.1} parent=5 // pred_check
        %p153 = pneg %p152
      $region22: #{llama_causal_lm_pipe_forward.1} parent=5 // pred_check_branch
        %155 = sbr.rel (%p153) target = $region24
      $region23: #{llama_causal_lm_pipe_forward.1} parent=5 // pred_region
        // Predicated region
        $region25: #{llama_causal_lm_pipe_forward.1} parent=23 // pred_check
          %p156 = pneg %p91
        $region26: #{llama_causal_lm_pipe_forward.1} parent=23 // pred_check_branch
          %158 = sbr.rel (%p156) target = $region28
        $region27: #{llama_causal_lm_pipe_forward.1} parent=23 // pred_region
          %s159 = sand.u32 %s81, 1
          %s160 = sand.u32 %s81, 1
          %s161 = smul.addr %s160, 256
          %s162 = scalar_lea.vmem [#allocation3], %s161
          %s163 = smul.u32 4, %s20
          %s164 = smul.addr %s163, 4
          %s165 = scalar_lea.vmem %s2, %s164
          // Predicated region
          $region29: #{llama_causal_lm_pipe_forward.1} parent=27 // pred_check
            _
          $region30: #{llama_causal_lm_pipe_forward.1} parent=27 // pred_check_branch
            %167 = sbr.rel (0) target = $region32
          $region31: #{llama_causal_lm_pipe_forward.1} parent=27 // pred_region
            // Predicated region
            $region33: #{llama_causal_lm_pipe_forward.1} parent=31 // pred_check
              _
            $region34: #{llama_causal_lm_pipe_forward.1} parent=31 // pred_check_branch
              %169 = sbr.rel (0) target = $region36
            $region35: #{llama_causal_lm_pipe_forward.1} parent=31 // pred_region
              loop: start=0, step=1, limit=1
              $region37: #{llama_causal_lm_pipe_forward.1} parent=35 // loop_pre_header
                _
              $region38: #{llama_causal_lm_pipe_forward.1} parent=35 // loop_header
                %s171 = sphi 0, %s175
                %p172 = scmp.ge.s32.totalorder %s171, 1
                %s176 = sphi %s165, %s165
                %s177 = sphi %s162, %s162
              $region39: #{llama_causal_lm_pipe_forward.1} parent=35 // loop_header_branch
                %174 = sbr.rel (%p172) target = $region43
              $region40: #{llama_causal_lm_pipe_forward.1} parent=35 // loop_body
                %v178 = vld [vmem:[%s176] sm:$0xff]
                %179 = vst [vmem:[%s177] sm:$0xff] %v178
                %v180 = vld [vmem:[%s176 + $0x8] sm:$0xff]
                %181 = vst [vmem:[%s177 + $0x8] sm:$0xff] %v180
                %v182 = vld [vmem:[%s176 + $0x20] sm:$0xff]
                %183 = vst [vmem:[%s177 + $0x10] sm:$0xff] %v182
                %v184 = vld [vmem:[%s176 + $0x28] sm:$0xff]
                %185 = vst [vmem:[%s177 + $0x18] sm:$0xff] %v184
                %v186 = vld [vmem:[%s176 + $0x40] sm:$0xff]
                %187 = vst [vmem:[%s177 + $0x20] sm:$0xff] %v186
                %v188 = vld [vmem:[%s176 + $0x48] sm:$0xff]
                %189 = vst [vmem:[%s177 + $0x28] sm:$0xff] %v188
                %v190 = vld [vmem:[%s176 + $0x60] sm:$0xff]
                %191 = vst [vmem:[%s177 + $0x30] sm:$0xff] %v190
                %v192 = vld [vmem:[%s176 + $0x68] sm:$0xff]
                %193 = vst [vmem:[%s177 + $0x38] sm:$0xff] %v192
                %v194 = vld [vmem:[%s176 + $0x80] sm:$0xff]
                %195 = vst [vmem:[%s177 + $0x40] sm:$0xff] %v194
                %v196 = vld [vmem:[%s176 + $0x88] sm:$0xff]
                %197 = vst [vmem:[%s177 + $0x48] sm:$0xff] %v196
                %v198 = vld [vmem:[%s176 + $0xa0] sm:$0xff]
                %199 = vst [vmem:[%s177 + $0x50] sm:$0xff] %v198
                %v200 = vld [vmem:[%s176 + $0xa8] sm:$0xff]
                %201 = vst [vmem:[%s177 + $0x58] sm:$0xff] %v200
                %v202 = vld [vmem:[%s176 + $0xc0] sm:$0xff]
                %203 = vst [vmem:[%s177 + $0x60] sm:$0xff] %v202
                %v204 = vld [vmem:[%s176 + $0xc8] sm:$0xff]
                %205 = vst [vmem:[%s177 + $0x68] sm:$0xff] %v204
                %v206 = vld [vmem:[%s176 + $0xe0] sm:$0xff]
                %207 = vst [vmem:[%s177 + $0x70] sm:$0xff] %v206
                %v208 = vld [vmem:[%s176 + $0xe8] sm:$0xff]
                %209 = vst [vmem:[%s177 + $0x78] sm:$0xff] %v208
                %v210 = vld [vmem:[%s176 + $0x100] sm:$0xff]
                %211 = vst [vmem:[%s177 + $0x80] sm:$0xff] %v210
                %v212 = vld [vmem:[%s176 + $0x108] sm:$0xff]
                %213 = vst [vmem:[%s177 + $0x88] sm:$0xff] %v212
                %v214 = vld [vmem:[%s176 + $0x120] sm:$0xff]
                %215 = vst [vmem:[%s177 + $0x90] sm:$0xff] %v214
                %v216 = vld [vmem:[%s176 + $0x128] sm:$0xff]
                %217 = vst [vmem:[%s177 + $0x98] sm:$0xff] %v216
                %v218 = vld [vmem:[%s176 + $0x140] sm:$0xff]
                %219 = vst [vmem:[%s177 + $0xa0] sm:$0xff] %v218
                %v220 = vld [vmem:[%s176 + $0x148] sm:$0xff]
                %221 = vst [vmem:[%s177 + $0xa8] sm:$0xff] %v220
                %v222 = vld [vmem:[%s176 + $0x160] sm:$0xff]
                %223 = vst [vmem:[%s177 + $0xb0] sm:$0xff] %v222
                %v224 = vld [vmem:[%s176 + $0x168] sm:$0xff]
                %225 = vst [vmem:[%s177 + $0xb8] sm:$0xff] %v224
                %v226 = vld [vmem:[%s176 + $0x180] sm:$0xff]
                %227 = vst [vmem:[%s177 + $0xc0] sm:$0xff] %v226
                %v228 = vld [vmem:[%s176 + $0x188] sm:$0xff]
                %229 = vst [vmem:[%s177 + $0xc8] sm:$0xff] %v228
                %v230 = vld [vmem:[%s176 + $0x1a0] sm:$0xff]
                %231 = vst [vmem:[%s177 + $0xd0] sm:$0xff] %v230
                %v232 = vld [vmem:[%s176 + $0x1a8] sm:$0xff]
                %233 = vst [vmem:[%s177 + $0xd8] sm:$0xff] %v232
                %v234 = vld [vmem:[%s176 + $0x1c0] sm:$0xff]
                %235 = vst [vmem:[%s177 + $0xe0] sm:$0xff] %v234
                %v236 = vld [vmem:[%s176 + $0x1c8] sm:$0xff]
                %237 = vst [vmem:[%s177 + $0xe8] sm:$0xff] %v236
                %v238 = vld [vmem:[%s176 + $0x1e0] sm:$0xff]
                %239 = vst [vmem:[%s177 + $0xf0] sm:$0xff] %v238
                %v240 = vld [vmem:[%s176 + $0x1e8] sm:$0xff]
                %241 = vst [vmem:[%s177 + $0xf8] sm:$0xff] %v240
              $region41: #{llama_causal_lm_pipe_forward.1} parent=35 // loop_footer
                %s175 = sadd.s32 1, %s171
              $region42: #{llama_causal_lm_pipe_forward.1} parent=35 // loop_footer_branch
                %170 = sbr.rel target = $region38
              $region43: #{llama_causal_lm_pipe_forward.1} parent=35 // loop_exit
                _
            $region36: #{llama_causal_lm_pipe_forward.1} parent=31 // pred_fallthru
              _
            // Predicated region
            $region44: #{llama_causal_lm_pipe_forward.1} parent=31 // pred_check
              _
            $region45: #{llama_causal_lm_pipe_forward.1} parent=31 // pred_check_branch
              %243 = sbr.rel target = $region47
            $region46: #{llama_causal_lm_pipe_forward.1} parent=31 // pred_region
              _
            $region47: #{llama_causal_lm_pipe_forward.1} parent=31 // pred_fallthru
              _
          $region32: #{llama_causal_lm_pipe_forward.1} parent=27 // pred_fallthru
            _
          %244 = vnop
        $region28: #{llama_causal_lm_pipe_forward.1} parent=23 // pred_fallthru
          _
      $region24: #{llama_causal_lm_pipe_forward.1} parent=5 // pred_fallthru
        _
      %p245 = scmp.le.s32.totalorder 1, %s12
      %p246 = scmp.lt.s32.totalorder %s12, 3
      %p247 = pnand %p245, %p246
      %p248 = pneg %p247
      // Predicated region
      $region48: #{llama_causal_lm_pipe_forward.1} parent=5 // pred_check
        _
      $region49: #{llama_causal_lm_pipe_forward.1} parent=5 // pred_check_branch
        %250 = sbr.rel (%p247) target = $region51
      $region50: #{llama_causal_lm_pipe_forward.1} parent=5 // pred_region
        %s251 = ssub.s32 %s12, 1
        %s252 = sand.u32 %s84, 1
        %s253 = sand.u32 %s84, 1
        %s254 = smul.addr %s253, 256
        %s255 = scalar_lea.vmem [#allocation3], %s254
        // Predicated region
        $region52: #{llama_causal_lm_pipe_forward.1} parent=50 // pred_check
          %p256 = pneg %p97
        $region53: #{llama_causal_lm_pipe_forward.1} parent=50 // pred_check_branch
          %258 = sbr.rel (%p256) target = $region55
        $region54: #{llama_causal_lm_pipe_forward.1} parent=50 // pred_region
          _
        $region55: #{llama_causal_lm_pipe_forward.1} parent=50 // pred_fallthru
          _
        %s259 = smul.u32 16, %s21
        %p260 = scmp.lt.s32.totalorder %s259, 15
        %s261 = scalar_select %p260, %s259, 15
        %s262 = smul.addr %s261, 8
        %s263 = scalar_lea.vmem %s0, %s262
        %p264 = pneg %p50
        %p265 = pneg %p47
        %p266 = pneg %p71
        %p267 = pneg %p68
        %s268 = sand.u32 %s84, 1
        %s269 = sand.u32 %s84, 1
        %s270 = smul.addr %s269, 256
        %s271 = scalar_lea.vmem [#allocation3], %s270
        %p272 = pneg %p97
        %p273 = pneg %p94
        %p274 = pneg %p125
        %p275 = pneg %p122
        %s276 = sand.u32 %s112, 1
        %s277 = scalar_lea.sflag [#allocation5], %s276
        %s278 = sand.u32 %s112, 1
        %s279 = smul.addr %s278, 512
        %s280 = scalar_lea.vmem [#allocation4], %s279
        %s281 = smul.u32 16, %s21
        %p282 = scmp.lt.s32.totalorder %s281, 15
        %s283 = scalar_select %p282, %s281, 15
        %s284 = smul.addr %s283, 8
        %s285 = scalar_lea.vmem %s0, %s284
        %s286 = smul.u32 16, %s21
        %s287 = smul.u32 4, %s22
        %s288 = smul.u32 16, %s21
        %s289 = smul.u32 4, %s22
        %p291 = scmp.eq.s32.totalorder %s22, 0
        // Predicated region
        $region56: #{llama_causal_lm_pipe_forward.1} parent=50 // pred_check
          %p292 = pneg %p291
        $region57: #{llama_causal_lm_pipe_forward.1} parent=50 // pred_check_branch
          %294 = sbr.rel (%p292) target = $region59
        $region58: #{llama_causal_lm_pipe_forward.1} parent=50 // pred_region
          %v295 = vld [vmem:[%s285] sm:$0xff]
          %v296 = vld [vmem:[%s285 + $0x8] sm:$0xff]
          %v297 = vld [vmem:[%s285 + $0x10] sm:$0xff]
          %v298 = vld [vmem:[%s285 + $0x18] sm:$0xff]
          %v299 = vld [vmem:[%s285 + $0x20] sm:$0xff]
          %v300 = vld [vmem:[%s285 + $0x28] sm:$0xff]
          %v301 = vld [vmem:[%s285 + $0x30] sm:$0xff]
          %v302 = vld [vmem:[%s285 + $0x38] sm:$0xff]
          %v303 = vld [vmem:[%s285 + $0x40] sm:$0xff]
          %v304 = vld [vmem:[%s285 + $0x48] sm:$0xff]
          %v305 = vld [vmem:[%s285 + $0x50] sm:$0xff]
          %v306 = vld [vmem:[%s285 + $0x58] sm:$0xff]
          %v307 = vld [vmem:[%s285 + $0x60] sm:$0xff]
          %v308 = vld [vmem:[%s285 + $0x68] sm:$0xff]
          %v309 = vld [vmem:[%s285 + $0x70] sm:$0xff]
          %v310 = vld [vmem:[%s285 + $0x78] sm:$0xff]
          %v311 = vmul.f32 %v295, %v295
          %v312 = vmul.f32 %v296, %v296
          %v313 = vmul.f32 %v297, %v297
          %v314 = vmul.f32 %v298, %v298
          %v315 = vmul.f32 %v299, %v299
          %v316 = vmul.f32 %v300, %v300
          %v317 = vmul.f32 %v301, %v301
          %v318 = vmul.f32 %v302, %v302
          %v319 = vmul.f32 %v303, %v303
          %v320 = vmul.f32 %v304, %v304
          %v321 = vmul.f32 %v305, %v305
          %v322 = vmul.f32 %v306, %v306
          %v323 = vmul.f32 %v307, %v307
          %v324 = vmul.f32 %v308, %v308
          %v325 = vmul.f32 %v309, %v309
          %v326 = vmul.f32 %v310, %v310
          %327 = vadd.xlane.f32.xlu0 %v311
          %v328 = vpop.xlane.xlu0 %327
          %329 = vadd.xlane.f32.xlu0 %v312
          %v330 = vpop.xlane.xlu0 %329
          %331 = vadd.xlane.f32.xlu0 %v313
          %v332 = vpop.xlane.xlu0 %331
          %333 = vadd.xlane.f32.xlu0 %v314
          %v334 = vpop.xlane.xlu0 %333
          %335 = vadd.xlane.f32.xlu0 %v315
          %v336 = vpop.xlane.xlu0 %335
          %337 = vadd.xlane.f32.xlu0 %v316
          %v338 = vpop.xlane.xlu0 %337
          %339 = vadd.xlane.f32.xlu0 %v317
          %v340 = vpop.xlane.xlu0 %339
          %341 = vadd.xlane.f32.xlu0 %v318
          %v342 = vpop.xlane.xlu0 %341
          %343 = vadd.xlane.f32.xlu0 %v319
          %v344 = vpop.xlane.xlu0 %343
          %345 = vadd.xlane.f32.xlu0 %v320
          %v346 = vpop.xlane.xlu0 %345
          %347 = vadd.xlane.f32.xlu0 %v321
          %v348 = vpop.xlane.xlu0 %347
          %349 = vadd.xlane.f32.xlu0 %v322
          %v350 = vpop.xlane.xlu0 %349
          %351 = vadd.xlane.f32.xlu0 %v323
          %v352 = vpop.xlane.xlu0 %351
          %353 = vadd.xlane.f32.xlu0 %v324
          %v354 = vpop.xlane.xlu0 %353
          %355 = vadd.xlane.f32.xlu0 %v325
          %v356 = vpop.xlane.xlu0 %355
          %357 = vadd.xlane.f32.xlu0 %v326
          %v358 = vpop.xlane.xlu0 %357
          %v359 = vrcp.pop 128.0
          %v360 = vmul.f32 %v328, %v359
          %v361 = vmul.f32 %v330, %v359
          %v362 = vmul.f32 %v332, %v359
          %v363 = vmul.f32 %v334, %v359
          %v364 = vmul.f32 %v336, %v359
          %v365 = vmul.f32 %v338, %v359
          %v366 = vmul.f32 %v340, %v359
          %v367 = vmul.f32 %v342, %v359
          %v368 = vmul.f32 %v344, %v359
          %v369 = vmul.f32 %v346, %v359
          %v370 = vmul.f32 %v348, %v359
          %v371 = vmul.f32 %v350, %v359
          %v372 = vmul.f32 %v352, %v359
          %v373 = vmul.f32 %v354, %v359
          %v374 = vmul.f32 %v356, %v359
          %v375 = vmul.f32 %v358, %v359
          %v376 = vadd.f32 %v360, 1e-06
          %v377 = vadd.f32 %v361, 1e-06
          %v378 = vadd.f32 %v362, 1e-06
          %v379 = vadd.f32 %v363, 1e-06
          %v380 = vadd.f32 %v364, 1e-06
          %v381 = vadd.f32 %v365, 1e-06
          %v382 = vadd.f32 %v366, 1e-06
          %v383 = vadd.f32 %v367, 1e-06
          %v384 = vadd.f32 %v368, 1e-06
          %v385 = vadd.f32 %v369, 1e-06
          %v386 = vadd.f32 %v370, 1e-06
          %v387 = vadd.f32 %v371, 1e-06
          %v388 = vadd.f32 %v372, 1e-06
          %v389 = vadd.f32 %v373, 1e-06
          %v390 = vadd.f32 %v374, 1e-06
          %v391 = vadd.f32 %v375, 1e-06
          %v392 = vrsqrt.pop %v376
          %v393 = vrsqrt.pop %v377
          %v394 = vrsqrt.pop %v378
          %v395 = vrsqrt.pop %v379
          %v396 = vrsqrt.pop %v380
          %v397 = vrsqrt.pop %v381
          %v398 = vrsqrt.pop %v382
          %v399 = vrsqrt.pop %v383
          %v400 = vrsqrt.pop %v384
          %v401 = vrsqrt.pop %v385
          %v402 = vrsqrt.pop %v386
          %v403 = vrsqrt.pop %v387
          %v404 = vrsqrt.pop %v388
          %v405 = vrsqrt.pop %v389
          %v406 = vrsqrt.pop %v390
          %v407 = vrsqrt.pop %v391
          %v408 = vmul.f32 %v295, %v392
          %v409 = vmul.f32 %v296, %v393
          %v410 = vmul.f32 %v297, %v394
          %v411 = vmul.f32 %v298, %v395
          %v412 = vmul.f32 %v299, %v396
          %v413 = vmul.f32 %v300, %v397
          %v414 = vmul.f32 %v301, %v398
          %v415 = vmul.f32 %v302, %v399
          %v416 = vmul.f32 %v303, %v400
          %v417 = vmul.f32 %v304, %v401
          %v418 = vmul.f32 %v305, %v402
          %v419 = vmul.f32 %v306, %v403
          %v420 = vmul.f32 %v307, %v404
          %v421 = vmul.f32 %v308, %v405
          %v422 = vmul.f32 %v309, %v406
          %v423 = vmul.f32 %v310, %v407
          %v424 = vld [vmem:[%s1] sm:$0x1]
          %v426 = vlaneseq
          %v427 = vshrl.u32 %v426, 7
          %v428 = vsub.s32 0, %v427
          %v429 = vrot.slane %v424, %v428
          %v431 = vmul.f32 %v408, %v429
          %v432 = vmul.f32 %v409, %v429
          %v433 = vmul.f32 %v410, %v429
          %v434 = vmul.f32 %v411, %v429
          %v435 = vmul.f32 %v412, %v429
          %v436 = vmul.f32 %v413, %v429
          %v437 = vmul.f32 %v414, %v429
          %v438 = vmul.f32 %v415, %v429
          %v439 = vmul.f32 %v416, %v429
          %v440 = vmul.f32 %v417, %v429
          %v441 = vmul.f32 %v418, %v429
          %v442 = vmul.f32 %v419, %v429
          %v443 = vmul.f32 %v420, %v429
          %v444 = vmul.f32 %v421, %v429
          %v445 = vmul.f32 %v422, %v429
          %v446 = vmul.f32 %v423, %v429
          %v447 = vpack.c.bf16 %v432, %v431
          %v448 = vpack.c.bf16 %v434, %v433
          %v449 = vpack.c.bf16 %v436, %v435
          %v450 = vpack.c.bf16 %v438, %v437
          %v451 = vpack.c.bf16 %v440, %v439
          %v452 = vpack.c.bf16 %v442, %v441
          %v453 = vpack.c.bf16 %v444, %v443
          %v454 = vpack.c.bf16 %v446, %v445
          %455 = vst [vmem:[#allocation2] sm:$0xff] %v447
          %456 = vst [vmem:[#allocation2 + $0x8] sm:$0xff] %v448
          %457 = vst [vmem:[#allocation2 + $0x10] sm:$0xff] %v449
          %458 = vst [vmem:[#allocation2 + $0x18] sm:$0xff] %v450
          %459 = vst [vmem:[#allocation2 + $0x20] sm:$0xff] %v451
          %460 = vst [vmem:[#allocation2 + $0x28] sm:$0xff] %v452
          %461 = vst [vmem:[#allocation2 + $0x30] sm:$0xff] %v453
          %462 = vst [vmem:[#allocation2 + $0x38] sm:$0xff] %v454
        $region59: #{llama_causal_lm_pipe_forward.1} parent=50 // pred_fallthru
          _
        %v463 = vld [vmem:[#allocation2] sm:$0xff]
        %v464 = vld [vmem:[#allocation2 + $0x8] sm:$0xff]
        %v465 = vld [vmem:[#allocation2 + $0x10] sm:$0xff]
        %v466 = vld [vmem:[#allocation2 + $0x18] sm:$0xff]
        %v467 = vld [vmem:[#allocation2 + $0x20] sm:$0xff]
        %v468 = vld [vmem:[#allocation2 + $0x28] sm:$0xff]
        %v469 = vld [vmem:[#allocation2 + $0x30] sm:$0xff]
        %v470 = vld [vmem:[#allocation2 + $0x38] sm:$0xff]
        %v471 = vld [vmem:[%s255] sm:$0xff]
        %v472 = vld [vmem:[%s255 + $0x8] sm:$0xff]
        %v473 = vld [vmem:[%s255 + $0x10] sm:$0xff]
        %v474 = vld [vmem:[%s255 + $0x18] sm:$0xff]
        %v475 = vld [vmem:[%s255 + $0x20] sm:$0xff]
        %v476 = vld [vmem:[%s255 + $0x28] sm:$0xff]
        %v477 = vld [vmem:[%s255 + $0x30] sm:$0xff]
        %v478 = vld [vmem:[%s255 + $0x38] sm:$0xff]
        %v479 = vld [vmem:[%s255 + $0x40] sm:$0xff]
        %v480 = vld [vmem:[%s255 + $0x48] sm:$0xff]
        %v481 = vld [vmem:[%s255 + $0x50] sm:$0xff]
        %v482 = vld [vmem:[%s255 + $0x58] sm:$0xff]
        %v483 = vld [vmem:[%s255 + $0x60] sm:$0xff]
        %v484 = vld [vmem:[%s255 + $0x68] sm:$0xff]
        %v485 = vld [vmem:[%s255 + $0x70] sm:$0xff]
        %v486 = vld [vmem:[%s255 + $0x78] sm:$0xff]
        %v487 = vld [vmem:[%s255 + $0x80] sm:$0xff]
        %v488 = vld [vmem:[%s255 + $0x88] sm:$0xff]
        %v489 = vld [vmem:[%s255 + $0x90] sm:$0xff]
        %v490 = vld [vmem:[%s255 + $0x98] sm:$0xff]
        %v491 = vld [vmem:[%s255 + $0xa0] sm:$0xff]
        %v492 = vld [vmem:[%s255 + $0xa8] sm:$0xff]
        %v493 = vld [vmem:[%s255 + $0xb0] sm:$0xff]
        %v494 = vld [vmem:[%s255 + $0xb8] sm:$0xff]
        %v495 = vld [vmem:[%s255 + $0xc0] sm:$0xff]
        %v496 = vld [vmem:[%s255 + $0xc8] sm:$0xff]
        %v497 = vld [vmem:[%s255 + $0xd0] sm:$0xff]
        %v498 = vld [vmem:[%s255 + $0xd8] sm:$0xff]
        %v499 = vld [vmem:[%s255 + $0xe0] sm:$0xff]
        %v500 = vld [vmem:[%s255 + $0xe8] sm:$0xff]
        %v501 = vld [vmem:[%s255 + $0xf0] sm:$0xff]
        %v502 = vld [vmem:[%s255 + $0xf8] sm:$0xff]
        %v535 = vunpack.c.l.b16 %v471
        %v536 = vunpack.c.h.b16 %v471
        %v537 = vunpack.c.l.b16 %v472
        %v538 = vunpack.c.h.b16 %v472
        %v539 = vunpack.c.l.b16 %v473
        %v540 = vunpack.c.h.b16 %v473
        %v541 = vunpack.c.l.b16 %v474
        %v542 = vunpack.c.h.b16 %v474
        %v543 = vunpack.c.l.b16 %v475
        %v544 = vunpack.c.h.b16 %v475
        %v545 = vunpack.c.l.b16 %v476
        %v546 = vunpack.c.h.b16 %v476
        %v547 = vunpack.c.l.b16 %v477
        %v548 = vunpack.c.h.b16 %v477
        %v549 = vunpack.c.l.b16 %v478
        %v550 = vunpack.c.h.b16 %v478
        %v551 = vunpack.c.l.b16 %v479
        %v552 = vunpack.c.h.b16 %v479
        %v553 = vunpack.c.l.b16 %v480
        %v554 = vunpack.c.h.b16 %v480
        %v555 = vunpack.c.l.b16 %v481
        %v556 = vunpack.c.h.b16 %v481
        %v557 = vunpack.c.l.b16 %v482
        %v558 = vunpack.c.h.b16 %v482
        %v559 = vunpack.c.l.b16 %v483
        %v560 = vunpack.c.h.b16 %v483
        %v561 = vunpack.c.l.b16 %v484
        %v562 = vunpack.c.h.b16 %v484
        %v563 = vunpack.c.l.b16 %v485
        %v564 = vunpack.c.h.b16 %v485
        %v565 = vunpack.c.l.b16 %v486
        %v566 = vunpack.c.h.b16 %v486
        %v567 = vunpack.c.l.b16 %v487
        %v568 = vunpack.c.h.b16 %v487
        %v569 = vunpack.c.l.b16 %v488
        %v570 = vunpack.c.h.b16 %v488
        %v571 = vunpack.c.l.b16 %v489
        %v572 = vunpack.c.h.b16 %v489
        %v573 = vunpack.c.l.b16 %v490
        %v574 = vunpack.c.h.b16 %v490
        %v575 = vunpack.c.l.b16 %v491
        %v576 = vunpack.c.h.b16 %v491
        %v577 = vunpack.c.l.b16 %v492
        %v578 = vunpack.c.h.b16 %v492
        %v579 = vunpack.c.l.b16 %v493
        %v580 = vunpack.c.h.b16 %v493
        %v581 = vunpack.c.l.b16 %v494
        %v582 = vunpack.c.h.b16 %v494
        %v583 = vunpack.c.l.b16 %v495
        %v584 = vunpack.c.h.b16 %v495
        %v585 = vunpack.c.l.b16 %v496
        %v586 = vunpack.c.h.b16 %v496
        %v587 = vunpack.c.l.b16 %v497
        %v588 = vunpack.c.h.b16 %v497
        %v589 = vunpack.c.l.b16 %v498
        %v590 = vunpack.c.h.b16 %v498
        %v591 = vunpack.c.l.b16 %v499
        %v592 = vunpack.c.h.b16 %v499
        %v593 = vunpack.c.l.b16 %v500
        %v594 = vunpack.c.h.b16 %v500
        %v595 = vunpack.c.l.b16 %v501
        %v596 = vunpack.c.h.b16 %v501
        %v597 = vunpack.c.l.b16 %v502
        %v598 = vunpack.c.h.b16 %v502
        %v599 = vpack.c.b16 %v539, %v535
        %v600 = vpack.c.b16 %v540, %v536
        %v601 = vpack.c.b16 %v541, %v537
        %v602 = vpack.c.b16 %v542, %v538
        %v603 = vpack.c.b16 %v547, %v543
        %v604 = vpack.c.b16 %v548, %v544
        %v605 = vpack.c.b16 %v549, %v545
        %v606 = vpack.c.b16 %v550, %v546
        %v607 = vpack.c.b16 %v555, %v551
        %v608 = vpack.c.b16 %v556, %v552
        %v609 = vpack.c.b16 %v557, %v553
        %v610 = vpack.c.b16 %v558, %v554
        %v611 = vpack.c.b16 %v563, %v559
        %v612 = vpack.c.b16 %v564, %v560
        %v613 = vpack.c.b16 %v565, %v561
        %v614 = vpack.c.b16 %v566, %v562
        %v615 = vpack.c.b16 %v571, %v567
        %v616 = vpack.c.b16 %v572, %v568
        %v617 = vpack.c.b16 %v573, %v569
        %v618 = vpack.c.b16 %v574, %v570
        %v619 = vpack.c.b16 %v579, %v575
        %v620 = vpack.c.b16 %v580, %v576
        %v621 = vpack.c.b16 %v581, %v577
        %v622 = vpack.c.b16 %v582, %v578
        %v623 = vpack.c.b16 %v587, %v583
        %v624 = vpack.c.b16 %v588, %v584
        %v625 = vpack.c.b16 %v589, %v585
        %v626 = vpack.c.b16 %v590, %v586
        %v627 = vpack.c.b16 %v595, %v591
        %v628 = vpack.c.b16 %v596, %v592
        %v629 = vpack.c.b16 %v597, %v593
        %v630 = vpack.c.b16 %v598, %v594
        %663 = vmatprep.subr.bf16.mxu0 %v600
        %664 = vmatpush1.bf16.msra.mxu0 %v599
        %665 = vmatprep.subr.bf16.mxu0 %v604
        %666 = vmatpush1.bf16.msra.mxu0 %v603
        %667 = vmatprep.subr.bf16.mxu0 %v608
        %668 = vmatpush1.bf16.msra.mxu0 %v607
        %669 = vmatprep.subr.bf16.mxu0 %v612
        %670 = vmatpush1.bf16.msra.mxu0 %v611
        %671 = vmatprep.subr.bf16.mxu0 %v616
        %672 = vmatpush1.bf16.msra.mxu0 %v615
        %673 = vmatprep.subr.bf16.mxu0 %v620
        %674 = vmatpush1.bf16.msra.mxu0 %v619
        %675 = vmatprep.subr.bf16.mxu0 %v624
        %676 = vmatpush1.bf16.msra.mxu0 %v623
        %677 = vmatprep.subr.bf16.mxu0 %v628
        %678 = vmatpush1.bf16.msra.mxu0 %v627
        %679 = vmatprep.subr.bf16.mxu0 0
        %680 = vmatpush1.bf16.msra.mxu0 0
        %681 = vmatprep.subr.bf16.mxu0 0
        %682 = vmatpush1.bf16.msra.mxu0 0
        %683 = vmatprep.subr.bf16.mxu0 0
        %684 = vmatpush1.bf16.msra.mxu0 0
        %685 = vmatprep.subr.bf16.mxu0 0
        %686 = vmatpush1.bf16.msra.mxu0 0
        %687 = vmatprep.subr.bf16.mxu0 0
        %688 = vmatpush1.bf16.msra.mxu0 0
        %689 = vmatprep.subr.bf16.mxu0 0
        %690 = vmatpush1.bf16.msra.mxu0 0
        %691 = vmatprep.subr.bf16.mxu0 0
        %692 = vmatpush1.bf16.msra.mxu0 0
        %693 = vmatprep.subr.bf16.mxu0 0
        %694 = vmatpush1.bf16.msra.mxu0 0
        %695 = vmatprep.mubr.bf16.mxu0 0
        %696 = vmatmul.mubr.bf16.gmra.mrb[0].mxu0 %v463
        %v697 = vpop.f32.mrb[0].mxu0
        %v698 = vadd.f32 0.0, %v697
        %v699 = vpop.f32.mrb[0].mxu0
        %v700 = vadd.f32 0.0, %v699
        %v701 = vpop.f32.mrb[0].mxu0
        %v702 = vadd.f32 0.0, %v701
        %v703 = vpop.f32.mrb[0].mxu0
        %v704 = vadd.f32 0.0, %v703
        %705 = vmatprep.mubr.bf16.mxu0 0
        %706 = vmatmul.mubr.bf16.gmra.mrb[0].mxu0 %v464
        %v707 = vpop.f32.mrb[0].mxu0
        %v708 = vadd.f32 0.0, %v707
        %v709 = vpop.f32.mrb[0].mxu0
        %v710 = vadd.f32 0.0, %v709
        %v711 = vpop.f32.mrb[0].mxu0
        %v712 = vadd.f32 0.0, %v711
        %v713 = vpop.f32.mrb[0].mxu0
        %v714 = vadd.f32 0.0, %v713
        %715 = vmatprep.mubr.bf16.mxu0 0
        %716 = vmatmul.mubr.bf16.gmra.mrb[0].mxu0 %v465
        %v717 = vpop.f32.mrb[0].mxu0
        %v718 = vadd.f32 0.0, %v717
        %v719 = vpop.f32.mrb[0].mxu0
        %v720 = vadd.f32 0.0, %v719
        %v721 = vpop.f32.mrb[0].mxu0
        %v722 = vadd.f32 0.0, %v721
        %v723 = vpop.f32.mrb[0].mxu0
        %v724 = vadd.f32 0.0, %v723
        %725 = vmatprep.mubr.bf16.mxu0 0
        %726 = vmatmul.mubr.bf16.gmra.mrb[0].mxu0 %v466
        %v727 = vpop.f32.mrb[0].mxu0
        %v728 = vadd.f32 0.0, %v727
        %v729 = vpop.f32.mrb[0].mxu0
        %v730 = vadd.f32 0.0, %v729
        %v731 = vpop.f32.mrb[0].mxu0
        %v732 = vadd.f32 0.0, %v731
        %v733 = vpop.f32.mrb[0].mxu0
        %v734 = vadd.f32 0.0, %v733
        %735 = vmatprep.mubr.bf16.mxu0 0
        %736 = vmatmul.mubr.bf16.gmra.mrb[0].mxu0 %v467
        %v737 = vpop.f32.mrb[0].mxu0
        %v738 = vadd.f32 0.0, %v737
        %v739 = vpop.f32.mrb[0].mxu0
        %v740 = vadd.f32 0.0, %v739
        %v741 = vpop.f32.mrb[0].mxu0
        %v742 = vadd.f32 0.0, %v741
        %v743 = vpop.f32.mrb[0].mxu0
        %v744 = vadd.f32 0.0, %v743
        %745 = vmatprep.mubr.bf16.mxu0 0
        %746 = vmatmul.mubr.bf16.gmra.mrb[0].mxu0 %v468
        %v747 = vpop.f32.mrb[0].mxu0
        %v748 = vadd.f32 0.0, %v747
        %v749 = vpop.f32.mrb[0].mxu0
        %v750 = vadd.f32 0.0, %v749
        %v751 = vpop.f32.mrb[0].mxu0
        %v752 = vadd.f32 0.0, %v751
        %v753 = vpop.f32.mrb[0].mxu0
        %v754 = vadd.f32 0.0, %v753
        %755 = vmatprep.mubr.bf16.mxu0 0
        %756 = vmatmul.mubr.bf16.gmra.mrb[0].mxu0 %v469
        %v757 = vpop.f32.mrb[0].mxu0
        %v758 = vadd.f32 0.0, %v757
        %v759 = vpop.f32.mrb[0].mxu0
        %v760 = vadd.f32 0.0, %v759
        %v761 = vpop.f32.mrb[0].mxu0
        %v762 = vadd.f32 0.0, %v761
        %v763 = vpop.f32.mrb[0].mxu0
        %v764 = vadd.f32 0.0, %v763
        %765 = vmatprep.mubr.bf16.mxu0 0
        %766 = vmatmul.mubr.bf16.gmra.mrb[0].mxu0 %v470
        %v767 = vpop.f32.mrb[0].mxu0
        %v768 = vadd.f32 0.0, %v767
        %v769 = vpop.f32.mrb[0].mxu0
        %v770 = vadd.f32 0.0, %v769
        %v771 = vpop.f32.mrb[0].mxu0
        %v772 = vadd.f32 0.0, %v771
        %v773 = vpop.f32.mrb[0].mxu0
        %v774 = vadd.f32 0.0, %v773
        %775 = vdwg.mxu0
        %776 = vmatprep.subr.bf16.mxu0 %v602
        %777 = vmatpush1.bf16.msra.mxu0 %v601
        %778 = vmatprep.subr.bf16.mxu0 %v606
        %779 = vmatpush1.bf16.msra.mxu0 %v605
        %780 = vmatprep.subr.bf16.mxu0 %v610
        %781 = vmatpush1.bf16.msra.mxu0 %v609
        %782 = vmatprep.subr.bf16.mxu0 %v614
        %783 = vmatpush1.bf16.msra.mxu0 %v613
        %784 = vmatprep.subr.bf16.mxu0 %v618
        %785 = vmatpush1.bf16.msra.mxu0 %v617
        %786 = vmatprep.subr.bf16.mxu0 %v622
        %787 = vmatpush1.bf16.msra.mxu0 %v621
        %788 = vmatprep.subr.bf16.mxu0 %v626
        %789 = vmatpush1.bf16.msra.mxu0 %v625
        %790 = vmatprep.subr.bf16.mxu0 %v630
        %791 = vmatpush1.bf16.msra.mxu0 %v629
        %792 = vmatprep.subr.bf16.mxu0 0
        %793 = vmatpush1.bf16.msra.mxu0 0
        %794 = vmatprep.subr.bf16.mxu0 0
        %795 = vmatpush1.bf16.msra.mxu0 0
        %796 = vmatprep.subr.bf16.mxu0 0
        %797 = vmatpush1.bf16.msra.mxu0 0
        %798 = vmatprep.subr.bf16.mxu0 0
        %799 = vmatpush1.bf16.msra.mxu0 0
        %800 = vmatprep.subr.bf16.mxu0 0
        %801 = vmatpush1.bf16.msra.mxu0 0
        %802 = vmatprep.subr.bf16.mxu0 0
        %803 = vmatpush1.bf16.msra.mxu0 0
        %804 = vmatprep.subr.bf16.mxu0 0
        %805 = vmatpush1.bf16.msra.mxu0 0
        %806 = vmatprep.subr.bf16.mxu0 0
        %807 = vmatpush1.bf16.msra.mxu0 0
        %808 = vmatprep.mubr.bf16.mxu0 0
        %809 = vmatmul.mubr.bf16.gmra.mrb[0].mxu0 %v463
        %v810 = vpop.f32.mrb[0].mxu0
        %v811 = vadd.f32 0.0, %v810
        %v812 = vpop.f32.mrb[0].mxu0
        %v813 = vadd.f32 0.0, %v812
        %v814 = vpop.f32.mrb[0].mxu0
        %v815 = vadd.f32 0.0, %v814
        %v816 = vpop.f32.mrb[0].mxu0
        %v817 = vadd.f32 0.0, %v816
        %818 = vmatprep.mubr.bf16.mxu0 0
        %819 = vmatmul.mubr.bf16.gmra.mrb[0].mxu0 %v464
        %v820 = vpop.f32.mrb[0].mxu0
        %v821 = vadd.f32 0.0, %v820
        %v822 = vpop.f32.mrb[0].mxu0
        %v823 = vadd.f32 0.0, %v822
        %v824 = vpop.f32.mrb[0].mxu0
        %v825 = vadd.f32 0.0, %v824
        %v826 = vpop.f32.mrb[0].mxu0
        %v827 = vadd.f32 0.0, %v826
        %828 = vmatprep.mubr.bf16.mxu0 0
        %829 = vmatmul.mubr.bf16.gmra.mrb[0].mxu0 %v465
        %v830 = vpop.f32.mrb[0].mxu0
        %v831 = vadd.f32 0.0, %v830
        %v832 = vpop.f32.mrb[0].mxu0
        %v833 = vadd.f32 0.0, %v832
        %v834 = vpop.f32.mrb[0].mxu0
        %v835 = vadd.f32 0.0, %v834
        %v836 = vpop.f32.mrb[0].mxu0
        %v837 = vadd.f32 0.0, %v836
        %838 = vmatprep.mubr.bf16.mxu0 0
        %839 = vmatmul.mubr.bf16.gmra.mrb[0].mxu0 %v466
        %v840 = vpop.f32.mrb[0].mxu0
        %v841 = vadd.f32 0.0, %v840
        %v842 = vpop.f32.mrb[0].mxu0
        %v843 = vadd.f32 0.0, %v842
        %v844 = vpop.f32.mrb[0].mxu0
        %v845 = vadd.f32 0.0, %v844
        %v846 = vpop.f32.mrb[0].mxu0
        %v847 = vadd.f32 0.0, %v846
        %848 = vmatprep.mubr.bf16.mxu0 0
        %849 = vmatmul.mubr.bf16.gmra.mrb[0].mxu0 %v467
        %v850 = vpop.f32.mrb[0].mxu0
        %v851 = vadd.f32 0.0, %v850
        %v852 = vpop.f32.mrb[0].mxu0
        %v853 = vadd.f32 0.0, %v852
        %v854 = vpop.f32.mrb[0].mxu0
        %v855 = vadd.f32 0.0, %v854
        %v856 = vpop.f32.mrb[0].mxu0
        %v857 = vadd.f32 0.0, %v856
        %858 = vmatprep.mubr.bf16.mxu0 0
        %859 = vmatmul.mubr.bf16.gmra.mrb[0].mxu0 %v468
        %v860 = vpop.f32.mrb[0].mxu0
        %v861 = vadd.f32 0.0, %v860
        %v862 = vpop.f32.mrb[0].mxu0
        %v863 = vadd.f32 0.0, %v862
        %v864 = vpop.f32.mrb[0].mxu0
        %v865 = vadd.f32 0.0, %v864
        %v866 = vpop.f32.mrb[0].mxu0
        %v867 = vadd.f32 0.0, %v866
        %868 = vmatprep.mubr.bf16.mxu0 0
        %869 = vmatmul.mubr.bf16.gmra.mrb[0].mxu0 %v469
        %v870 = vpop.f32.mrb[0].mxu0
        %v871 = vadd.f32 0.0, %v870
        %v872 = vpop.f32.mrb[0].mxu0
        %v873 = vadd.f32 0.0, %v872
        %v874 = vpop.f32.mrb[0].mxu0
        %v875 = vadd.f32 0.0, %v874
        %v876 = vpop.f32.mrb[0].mxu0
        %v877 = vadd.f32 0.0, %v876
        %878 = vmatprep.mubr.bf16.mxu0 0
        %879 = vmatmul.mubr.bf16.gmra.mrb[0].mxu0 %v470
        %v880 = vpop.f32.mrb[0].mxu0
        %v881 = vadd.f32 0.0, %v880
        %v882 = vpop.f32.mrb[0].mxu0
        %v883 = vadd.f32 0.0, %v882
        %v884 = vpop.f32.mrb[0].mxu0
        %v885 = vadd.f32 0.0, %v884
        %v886 = vpop.f32.mrb[0].mxu0
        %v887 = vadd.f32 0.0, %v886
        %888 = vdwg.mxu0
        %889 = vst [vmem:[%s280] sm:$0xff] %v698
        %890 = vst [vmem:[%s280 + $0x8] sm:$0xff] %v700
        %891 = vst [vmem:[%s280 + $0x10] sm:$0xff] %v811
        %892 = vst [vmem:[%s280 + $0x18] sm:$0xff] %v813
        %893 = vst [vmem:[%s280 + $0x20] sm:$0xff] %v702
        %894 = vst [vmem:[%s280 + $0x28] sm:$0xff] %v704
        %895 = vst [vmem:[%s280 + $0x30] sm:$0xff] %v815
        %896 = vst [vmem:[%s280 + $0x38] sm:$0xff] %v817
        %897 = vst [vmem:[%s280 + $0x40] sm:$0xff] %v708
        %898 = vst [vmem:[%s280 + $0x48] sm:$0xff] %v710
        %899 = vst [vmem:[%s280 + $0x50] sm:$0xff] %v821
        %900 = vst [vmem:[%s280 + $0x58] sm:$0xff] %v823
        %901 = vst [vmem:[%s280 + $0x60] sm:$0xff] %v712
        %902 = vst [vmem:[%s280 + $0x68] sm:$0xff] %v714
        %903 = vst [vmem:[%s280 + $0x70] sm:$0xff] %v825
        %904 = vst [vmem:[%s280 + $0x78] sm:$0xff] %v827
        %905 = vst [vmem:[%s280 + $0x80] sm:$0xff] %v718
        %906 = vst [vmem:[%s280 + $0x88] sm:$0xff] %v720
        %907 = vst [vmem:[%s280 + $0x90] sm:$0xff] %v831
        %908 = vst [vmem:[%s280 + $0x98] sm:$0xff] %v833
        %909 = vst [vmem:[%s280 + $0xa0] sm:$0xff] %v722
        %910 = vst [vmem:[%s280 + $0xa8] sm:$0xff] %v724
        %911 = vst [vmem:[%s280 + $0xb0] sm:$0xff] %v835
        %912 = vst [vmem:[%s280 + $0xb8] sm:$0xff] %v837
        %913 = vst [vmem:[%s280 + $0xc0] sm:$0xff] %v728
        %914 = vst [vmem:[%s280 + $0xc8] sm:$0xff] %v730
        %915 = vst [vmem:[%s280 + $0xd0] sm:$0xff] %v841
        %916 = vst [vmem:[%s280 + $0xd8] sm:$0xff] %v843
        %917 = vst [vmem:[%s280 + $0xe0] sm:$0xff] %v732
        %918 = vst [vmem:[%s280 + $0xe8] sm:$0xff] %v734
        %919 = vst [vmem:[%s280 + $0xf0] sm:$0xff] %v845
        %920 = vst [vmem:[%s280 + $0xf8] sm:$0xff] %v847
        %921 = vst [vmem:[%s280 + $0x100] sm:$0xff] %v738
        %922 = vst [vmem:[%s280 + $0x108] sm:$0xff] %v740
        %923 = vst [vmem:[%s280 + $0x110] sm:$0xff] %v851
        %924 = vst [vmem:[%s280 + $0x118] sm:$0xff] %v853
        %925 = vst [vmem:[%s280 + $0x120] sm:$0xff] %v742
        %926 = vst [vmem:[%s280 + $0x128] sm:$0xff] %v744
        %927 = vst [vmem:[%s280 + $0x130] sm:$0xff] %v855
        %928 = vst [vmem:[%s280 + $0x138] sm:$0xff] %v857
        %929 = vst [vmem:[%s280 + $0x140] sm:$0xff] %v748
        %930 = vst [vmem:[%s280 + $0x148] sm:$0xff] %v750
        %931 = vst [vmem:[%s280 + $0x150] sm:$0xff] %v861
        %932 = vst [vmem:[%s280 + $0x158] sm:$0xff] %v863
        %933 = vst [vmem:[%s280 + $0x160] sm:$0xff] %v752
        %934 = vst [vmem:[%s280 + $0x168] sm:$0xff] %v754
        %935 = vst [vmem:[%s280 + $0x170] sm:$0xff] %v865
        %936 = vst [vmem:[%s280 + $0x178] sm:$0xff] %v867
        %937 = vst [vmem:[%s280 + $0x180] sm:$0xff] %v758
        %938 = vst [vmem:[%s280 + $0x188] sm:$0xff] %v760
        %939 = vst [vmem:[%s280 + $0x190] sm:$0xff] %v871
        %940 = vst [vmem:[%s280 + $0x198] sm:$0xff] %v873
        %941 = vst [vmem:[%s280 + $0x1a0] sm:$0xff] %v762
        %942 = vst [vmem:[%s280 + $0x1a8] sm:$0xff] %v764
        %943 = vst [vmem:[%s280 + $0x1b0] sm:$0xff] %v875
        %944 = vst [vmem:[%s280 + $0x1b8] sm:$0xff] %v877
        %945 = vst [vmem:[%s280 + $0x1c0] sm:$0xff] %v768
        %946 = vst [vmem:[%s280 + $0x1c8] sm:$0xff] %v770
        %947 = vst [vmem:[%s280 + $0x1d0] sm:$0xff] %v881
        %948 = vst [vmem:[%s280 + $0x1d8] sm:$0xff] %v883
        %949 = vst [vmem:[%s280 + $0x1e0] sm:$0xff] %v772
        %950 = vst [vmem:[%s280 + $0x1e8] sm:$0xff] %v774
        %951 = vst [vmem:[%s280 + $0x1f0] sm:$0xff] %v885
        %952 = vst [vmem:[%s280 + $0x1f8] sm:$0xff] %v887
        %s953 = sand.u32 %s112, 1
        %s954 = scalar_lea.sflag [#allocation5], %s953
        %s955 = sand.u32 %s112, 1
        %s956 = smul.addr %s955, 512
        %s957 = scalar_lea.vmem [#allocation4], %s956
        // Predicated region
        $region60: #{llama_causal_lm_pipe_forward.1} parent=50 // pred_check
          %p958 = pneg %p122
        $region61: #{llama_causal_lm_pipe_forward.1} parent=50 // pred_check_branch
          %960 = sbr.rel (%p958) target = $region63
        $region62: #{llama_causal_lm_pipe_forward.1} parent=50 // pred_region
          %s961 = smul.u32 16, %s21
          %s962 = smul.u32 4, %s22
          %s964 = ssub.s32 8192, 8192
          %965 = vsyncadd %s954, %s964
          %s966 = smul.addr %s961, 8
          %s967 = sadd.s32 %s962, %s966
          %s968 = smul.addr %s967, 128
          %s969 = scalar_lea.hbm %s3, %s968
          %s970 = sshll.u32 %s957, 4
          %s971 = int_to_ptr.vmem [resolvable:$true] %s970
          %976 = dma.vmem_to_hbm [thread:$0]  %s971, 8192, %s969, %s954, 512, 1024, 32
        $region63: #{llama_causal_lm_pipe_forward.1} parent=50 // pred_fallthru
          _
      $region51: #{llama_causal_lm_pipe_forward.1} parent=5 // pred_fallthru
        _
      %p977 = scmp.le.s32.totalorder 2, %s12
      // Predicated region
      $region64: #{llama_causal_lm_pipe_forward.1} parent=5 // pred_check
        %p978 = pneg %p977
      $region65: #{llama_causal_lm_pipe_forward.1} parent=5 // pred_check_branch
        %980 = sbr.rel (%p978) target = $region67
      $region66: #{llama_causal_lm_pipe_forward.1} parent=5 // pred_region
        %s981 = ssub.s32 %s12, 2
        // Predicated region
        $region68: #{llama_causal_lm_pipe_forward.1} parent=66 // pred_check
          %p982 = pneg %p128
        $region69: #{llama_causal_lm_pipe_forward.1} parent=66 // pred_check_branch
          %984 = sbr.rel (%p982) target = $region71
        $region70: #{llama_causal_lm_pipe_forward.1} parent=66 // pred_region
          %s985 = sand.u32 %s113, 1
          %s986 = scalar_lea.sflag [#allocation5], %s985
          %s987 = sand.u32 %s113, 1
          %s988 = smul.addr %s987, 512
          %s989 = scalar_lea.vmem [#allocation4], %s988
          %990 = dma.done %s986, 8192
        $region71: #{llama_causal_lm_pipe_forward.1} parent=66 // pred_fallthru
          _
      $region67: #{llama_causal_lm_pipe_forward.1} parent=5 // pred_fallthru
        _
    $region6: #{llama_causal_lm_pipe_forward.1} parent=1 // loop_footer
      %s16 = sadd.s32 1, %s12
    $region7: #{llama_causal_lm_pipe_forward.1} parent=1 // loop_footer_branch
      %11 = sbr.rel target = $region3
    $region8: #{llama_causal_lm_pipe_forward.1} parent=1 // loop_exit
      _
    %991 = vsyncpa [#allocation5], 1
    %s992 = scalar_lea.sflag [#allocation5], 1
    %993 = vsyncpa %s992, 1

</llo_original>
